<compile_context>
chip_gen: v5e
topology: v5e:2x2
jax: 0.10.0
libtpu: 0.0.40
codegen_flags: <defaults>
</compile_context>

<pallas_src>
import jax
import jax.numpy as jnp
from jax.experimental import pallas as pl
from jax.experimental.pallas import tpu as pltpu


def ebm_kernel(x_ref, w1t_ref, b1_ref, w2t_ref, b2_ref, o_ref):
    # x: (TM, D)   w1t: (D, H)   b1: (1, H)   w2t: (H, 1)   b2: (1, 1)
    # o: (TM, 1)
    h = jnp.dot(x_ref[...], w1t_ref[...], preferred_element_type=jnp.float32)
    h = h + b1_ref[...]
    h = jnp.maximum(h, 0.2 * h)                    # LeakyReLU(0.2): mul + max

    # Second linear (out_features = 1) on the MXU: K=64, N=1 adds only a few
    # vmatmul pushes and frees the XLU / extended slots entirely.
    y = jnp.dot(h, w2t_ref[...], preferred_element_type=jnp.float32)  # (TM, 1)
    o_ref[...] = (y + b2_ref[...]).astype(o_ref.dtype)


def _round_up(n, m):
    return ((n + m - 1) // m) * m


def _cdiv(a, b):
    return -(-a // b)


def ebm_forward(x, w1, b1, w2, b2, *, block_rows=8192):
    """EBM MLP forward: x (B, latent_dim) -> (B, 1).

    Weights are PyTorch-shaped: w1 (H, D), b1 (H,), w2 (1, H), b2 (1,).
    """
    B, D = x.shape
    H = w1.shape[0]
    dtype = x.dtype

    # One-time layout plumbing in the wrapper (loop-invariant):
    w1t = jnp.asarray(w1, dtype).T.reshape(D, H)          # (D, H): no in-kernel transpose
    b1r = jnp.asarray(b1, dtype).reshape(1, H)
    w2t = jnp.asarray(w2, dtype).reshape(1, H).T.reshape(H, 1)   # (H, 1)
    b2r = jnp.asarray(b2, dtype).reshape(1, 1)

    # Batch tiling:
    #  * tiny batches (B <= 8): single tile equal to B (block dim == array dim
    #    satisfies the (8,128) rule without padding).
    #  * otherwise: a multiple of 8, capped at block_rows, and no larger than
    #    ceil(B/2) so the grid has >= 2 steps (v7x megacore sharding).
    block_rows = _round_up(max(block_rows, 8), 8)
    if B <= 8:
        tm = B
    else:
        tm = max(8, min(block_rows, _round_up(_cdiv(B, 2), 8)))
    n_tiles = _cdiv(B, tm)   # edge block (if any) is handled by Pallas masking

    itemsize = jnp.dtype(dtype).itemsize
    cost = pl.CostEstimate(
        flops=2 * B * D * H + 2 * B * H,
        transcendentals=0,
        bytes_accessed=itemsize * (B * D + B + D * H + 2 * H + 1),
    )

    out = pl.pallas_call(
        ebm_kernel,
        out_shape=jax.ShapeDtypeStruct((B, 1), dtype),
        grid=(n_tiles,),
        in_specs=[
            pl.BlockSpec((tm, D), lambda i: (i, 0)),   # x: streamed over batch
            pl.BlockSpec((D, H), lambda i: (0, 0)),    # w1^T: resident in VMEM
            pl.BlockSpec((1, H), lambda i: (0, 0)),    # b1:   resident
            pl.BlockSpec((H, 1), lambda i: (0, 0)),    # w2^T: resident
            pl.BlockSpec((1, 1), lambda i: (0, 0)),    # b2:   resident
        ],
        out_specs=pl.BlockSpec((tm, 1), lambda i: (i, 0)),
        compiler_params=pltpu.CompilerParams(
            dimension_semantics=("parallel",),
        ),
        cost_estimate=cost,
    )(x, w1t, b1r, w2t, b2r)

    return out


def _reference(x, w1, b1, w2, b2):
    h = x @ w1.T + b1.reshape(1, -1)
    h = jnp.where(h > 0, h, 0.2 * h)
    y = jnp.dot(h, w2.T, precision=jax.lax.Precision.HIGHEST)
    return y + b2.reshape(1, -1)


if __name__ == "__main__":
    latent_dim, n_hidden = 32, 64

    key = jax.random.PRNGKey(0)
    kx, k1, k2, k3, k4 = jax.random.split(key, 5)

    # Deterministic synthetic parameters (PyTorch-shaped: (out, in)).
    bound1 = 1.0 / (latent_dim ** 0.5)
    bound2 = 1.0 / (n_hidden ** 0.5)
    w1 = jax.random.uniform(k1, (n_hidden, latent_dim),
                            minval=-bound1, maxval=bound1, dtype=jnp.float32)
    b1 = jax.random.uniform(k2, (n_hidden,),
                            minval=-bound1, maxval=bound1, dtype=jnp.float32)
    w2 = jax.random.uniform(k3, (1, n_hidden),
                            minval=-bound2, maxval=bound2, dtype=jnp.float32)
    b2 = jax.random.uniform(k4, (1,),
                            minval=-bound2, maxval=bound2, dtype=jnp.float32)

    # (batch, block_rows) cases:
    #   8    -> tiny single-tile path
    #   300  -> forced small tiles: multi-tile pipeline + masked edge block
    #   2088 -> default path: 2 parallel tiles, non-aligned edge, no padding
    for batch, br in ((8, 8192), (300, 128), (2088, 8192)):
        kxi = jax.random.fold_in(kx, batch)
        x = jax.random.normal(kxi, (batch, latent_dim), dtype=jnp.float32)

        out = jax.block_until_ready(ebm_forward(x, w1, b1, w2, b2, block_rows=br))
        ref = _reference(x, w1, b1, w2, b2)

        assert out.shape == (batch, 1), out.shape
        assert jnp.allclose(out, ref, atol=1e-4, rtol=1e-4), (
            "mismatch vs reference, max abs err = "
            + str(float(jnp.max(jnp.abs(out - ref)))))

    print("KERNEL_OK")
</pallas_src>

<mosaic_0001>
module attributes {stable_mosaic.version = 11 : i64} {
  func.func @ebm_kernel(%arg0: i32, %arg1: memref<8x32xf32, #tpu.memory_space<vmem>>, %arg2: memref<32x64xf32, #tpu.memory_space<vmem>>, %arg3: memref<1x64xf32, #tpu.memory_space<vmem>>, %arg4: memref<64x1xf32, #tpu.memory_space<vmem>>, %arg5: memref<1x1xf32, #tpu.memory_space<vmem>>, %arg6: memref<8x1xf32, #tpu.memory_space<vmem>>) attributes {dimension_semantics = [#tpu.dimension_semantics<parallel>], iteration_bounds = array<i64: 1>, scalar_prefetch = 0 : i64, scratch_operands = 0 : i64, tpu.core_type = #tpu.core_type<tc>, window_params = [{transform_indices = @transform_0, window_bounds = array<i64: 8, 32>}, {pipeline_mode = #tpu.pipeline_mode<synchronous>, transform_indices = @transform_1, window_bounds = array<i64: 32, 64>}, {pipeline_mode = #tpu.pipeline_mode<synchronous>, transform_indices = @transform_2, window_bounds = array<i64: 1, 64>}, {pipeline_mode = #tpu.pipeline_mode<synchronous>, transform_indices = @transform_3, window_bounds = array<i64: 64, 1>}, {pipeline_mode = #tpu.pipeline_mode<synchronous>, transform_indices = @transform_4, window_bounds = array<i64: 1, 1>}, {transform_indices = @transform_5, window_bounds = array<i64: 8, 1>}]} {
    %c0 = arith.constant 0 : index
    %c0_0 = arith.constant 0 : index
    %0 = vector.load %arg1[%c0, %c0_0] : memref<8x32xf32, #tpu.memory_space<vmem>>, vector<8x32xf32>
    %c0_1 = arith.constant 0 : index
    %c0_2 = arith.constant 0 : index
    %1 = vector.load %arg2[%c0_1, %c0_2] : memref<32x64xf32, #tpu.memory_space<vmem>>, vector<32x64xf32>
    %cst = arith.constant dense<0.000000e+00> : vector<8x64xf32>
    %2 = tpu.matmul %0, %1, %cst {dimension_numbers = #tpu.dot_dimension_numbers<[1], [0], [0], [1], [0, 0, 1, 1], [], []>} : vector<8x32xf32>, vector<32x64xf32>, vector<8x64xf32> -> vector<8x64xf32>
    %c0_3 = arith.constant 0 : index
    %c0_4 = arith.constant 0 : index
    %3 = vector.load %arg3[%c0_3, %c0_4] : memref<1x64xf32, #tpu.memory_space<vmem>>, vector<1x64xf32>
    %4 = vector.broadcast %3 : vector<1x64xf32> to vector<8x64xf32>
    %5 = arith.addf %2, %4 : vector<8x64xf32>
    %cst_5 = arith.constant 2.000000e-01 : f32
    %6 = vector.broadcast %cst_5 : f32 to vector<8x64xf32>
    %7 = arith.mulf %6, %5 : vector<8x64xf32>
    %8 = arith.maximumf %5, %7 : vector<8x64xf32>
    %c0_6 = arith.constant 0 : index
    %c0_7 = arith.constant 0 : index
    %9 = vector.load %arg4[%c0_6, %c0_7] : memref<64x1xf32, #tpu.memory_space<vmem>>, vector<64x1xf32>
    %cst_8 = arith.constant dense<0.000000e+00> : vector<8x1xf32>
    %10 = tpu.matmul %8, %9, %cst_8 {dimension_numbers = #tpu.dot_dimension_numbers<[1], [0], [0], [1], [0, 0, 1, 1], [], []>} : vector<8x64xf32>, vector<64x1xf32>, vector<8x1xf32> -> vector<8x1xf32>
    %c0_9 = arith.constant 0 : index
    %c0_10 = arith.constant 0 : index
    %11 = vector.load %arg5[%c0_9, %c0_10] : memref<1x1xf32, #tpu.memory_space<vmem>>, vector<1x1xf32>
    %12 = vector.broadcast %11 : vector<1x1xf32> to vector<8x1xf32>
    %13 = arith.addf %10, %12 : vector<8x1xf32>
    %c0_11 = arith.constant 0 : index
    %c0_12 = arith.constant 0 : index
    %14 = vector.load %arg6[%c0_11, %c0_12] : memref<8x1xf32, #tpu.memory_space<vmem>>, vector<8x1xf32>
    tpu.vector_store %arg6[%c0_11, %c0_12], %13 {strides = array<i32>} : memref<8x1xf32, #tpu.memory_space<vmem>>, vector<8x1xf32>,
    return
  }
  func.func @transform_0(%arg0: i32) -> (i32, i32) {
    %c0_i32 = arith.constant 0 : i32
    %c0_i32_0 = arith.constant 0 : i32
    return %arg0, %c0_i32 : i32, i32
  }
  func.func @transform_1(%arg0: i32) -> (i32, i32) {
    %c0_i32 = arith.constant 0 : i32
    %c0_i32_0 = arith.constant 0 : i32
    %c0_i32_1 = arith.constant 0 : i32
    return %c0_i32, %c0_i32_0 : i32, i32
  }
  func.func @transform_2(%arg0: i32) -> (i32, i32) {
    %c0_i32 = arith.constant 0 : i32
    %c0_i32_0 = arith.constant 0 : i32
    %c0_i32_1 = arith.constant 0 : i32
    return %c0_i32, %c0_i32_0 : i32, i32
  }
  func.func @transform_3(%arg0: i32) -> (i32, i32) {
    %c0_i32 = arith.constant 0 : i32
    %c0_i32_0 = arith.constant 0 : i32
    %c0_i32_1 = arith.constant 0 : i32
    return %c0_i32, %c0_i32_0 : i32, i32
  }
  func.func @transform_4(%arg0: i32) -> (i32, i32) {
    %c0_i32 = arith.constant 0 : i32
    %c0_i32_0 = arith.constant 0 : i32
    %c0_i32_1 = arith.constant 0 : i32
    return %c0_i32, %c0_i32_0 : i32, i32
  }
  func.func @transform_5(%arg0: i32) -> (i32, i32) {
    %c0_i32 = arith.constant 0 : i32
    %c0_i32_0 = arith.constant 0 : i32
    return %arg0, %c0_i32 : i32, i32
  }
}

</mosaic_0001>

<llo_original>
// kernel: tpu_custom_call.1
$region0: #{tpu_custom_call.1}
  #allocation0 [shape = 'u32[]', space=smem, size = 0x4, offset = 0x4, fixed_abs, tag = 'smem constant byte address 0x4 - core index']
  #allocation1 [shape = 'u32[72,128]{1,0:T(1,128)}', space=vmem, size = 0x9000, scoped, tag = 'internal scratch']
  #allocation2 [shape = 'f32[1,1]{1,0:T(1,128)S(1)}', space=vmem, size = 0x200, scoped, tag = 'scoped memory for tpu_custom_call.1']
  %s0 = inlined_call_operand.vmem [shape: f32[8,32], index: 0, kind: input, shape index: {}]
  %s1 = inlined_call_operand.vmem [shape: f32[32,64], index: 1, kind: input, shape index: {}]
  %s2 = inlined_call_operand.vmem [shape: f32[1,64], index: 2, kind: input, shape index: {}]
  %s3 = inlined_call_operand.vmem [shape: f32[64,1], index: 3, kind: input, shape index: {}]
  %s4 = inlined_call_operand.<no memory space> [shape: f32[1,1], index: 4, kind: input, shape index: {}]
  %s5 = inlined_call_operand.vmem [shape: f32[8,1], index: 5, kind: output, shape index: {}]
  %s6 = sld [smem:[#allocation0]]
  $region30: #{tpu_custom_call.1} parent=0
    _
  %s8 = ssub.s32 1, %s6
  %s9 = scalar_select 0, %s8, %s6
  %v10 = vstv %s4
  %11 = vst [vmem:[#allocation2] sm:$0x1] %v10
  // Predicated region
  $region2: #{tpu_custom_call.1} parent=0 // pred_check
    _
  $region3: #{tpu_custom_call.1} parent=0 // pred_check_branch
    %13 = sbr.rel (0) target = $region5
  $region4: #{tpu_custom_call.1} parent=0 // pred_region
    _
  $region5: #{tpu_custom_call.1} parent=0 // pred_fallthru
    _
  // Predicated region
  $region6: #{tpu_custom_call.1} parent=0 // pred_check
    _
  $region7: #{tpu_custom_call.1} parent=0 // pred_check_branch
    %15 = sbr.rel (0) target = $region9
  $region8: #{tpu_custom_call.1} parent=0 // pred_region
    _
  $region9: #{tpu_custom_call.1} parent=0 // pred_fallthru
    _
  // Predicated region
  $region10: #{tpu_custom_call.1} parent=0 // pred_check
    _
  $region11: #{tpu_custom_call.1} parent=0 // pred_check_branch
    %17 = sbr.rel (0) target = $region13
  $region12: #{tpu_custom_call.1} parent=0 // pred_region
    _
  $region13: #{tpu_custom_call.1} parent=0 // pred_fallthru
    _
  // Predicated region
  $region14: #{tpu_custom_call.1} parent=0 // pred_check
    _
  $region15: #{tpu_custom_call.1} parent=0 // pred_check_branch
    %19 = sbr.rel (0) target = $region17
  $region16: #{tpu_custom_call.1} parent=0 // pred_region
    _
  $region17: #{tpu_custom_call.1} parent=0 // pred_fallthru
    _
  // Predicated region
  $region18: #{tpu_custom_call.1} parent=0 // pred_check
    _
  $region19: #{tpu_custom_call.1} parent=0 // pred_check_branch
    %21 = sbr.rel (0) target = $region21
  $region20: #{tpu_custom_call.1} parent=0 // pred_region
    _
  $region21: #{tpu_custom_call.1} parent=0 // pred_fallthru
    _
  %v22 = vld [vmem:[%s0] sm:$0xff]
  %v23 = vld [vmem:[%s1] sm:$0xff]
  %v24 = vld [vmem:[%s1 + $0x8] sm:$0xff]
  %v25 = vld [vmem:[%s1 + $0x10] sm:$0xff]
  %v26 = vld [vmem:[%s1 + $0x18] sm:$0xff]
  %v27 = vld [vmem:[%s2] sm:$0x1]
  %v29 = vperm.slane %v27, 0
  %vm31 = vcmask 261120
  %v33 = vsel %vm31, %v22, 0
  %35 = vmatpush.msra.mxu0 0.0
  %36 = vmatpush.msra.mxu0 0.0
  %37 = vmatpush.msra.mxu0 0.0
  %38 = vmatpush.msra.mxu0 0.0
  %39 = vmatpush.msra.mxu0 0.0
  %40 = vmatpush.msra.mxu0 0.0
  %41 = vmatpush.msra.mxu0 0.0
  %42 = vmatpush.msra.mxu0 0.0
  %43 = vmatpush.msra.mxu0 0.0
  %44 = vmatpush.msra.mxu0 0.0
  %45 = vmatpush.msra.mxu0 0.0
  %46 = vmatpush.msra.mxu0 0.0
  %47 = vmatpush.msra.mxu0 %v26
  %48 = vmatpush.msra.mxu0 %v25
  %49 = vmatpush.msra.mxu0 %v24
  %50 = vmatpush.msra.mxu0 %v23
  %51 = vmatmul.f32.gmra.mxu0 %v33
  %v52 = vpop.f32.mrf.mxu0
  %v53 = vadd.f32 %v29, %v52
  %54 = vdwg.mxu0
  %v55 = vmul.f32 %v53, 0.2
  %v56 = vmax.f32 %v53, %v55
  %v57 = vld [vmem:[%s3] sm:$0xff]
  %v58 = vld [vmem:[%s3 + $0x8] sm:$0xff]
  %v59 = vld [vmem:[%s3 + $0x10] sm:$0xff]
  %v60 = vld [vmem:[%s3 + $0x18] sm:$0xff]
  %v61 = vld [vmem:[%s3 + $0x20] sm:$0xff]
  %v62 = vld [vmem:[%s3 + $0x28] sm:$0xff]
  %v63 = vld [vmem:[%s3 + $0x30] sm:$0xff]
  %v64 = vld [vmem:[%s3 + $0x38] sm:$0xff]
  %v65 = vld [vmem:[#allocation2] sm:$0x1]
  %v67 = vperm.slane %v65, 0
  %vm69 = vcmask 523264
  %v71 = vsel %vm69, %v56, 0
  %73 = vmatpush.msra.mxu0 0.0
  %74 = vmatpush.msra.mxu0 0.0
  %75 = vmatpush.msra.mxu0 0.0
  %76 = vmatpush.msra.mxu0 0.0
  %77 = vmatpush.msra.mxu0 0.0
  %78 = vmatpush.msra.mxu0 0.0
  %79 = vmatpush.msra.mxu0 0.0
  %80 = vmatpush.msra.mxu0 0.0
  %81 = vmatpush.msra.mxu0 %v64
  %82 = vmatpush.msra.mxu0 %v63
  %83 = vmatpush.msra.mxu0 %v62
  %84 = vmatpush.msra.mxu0 %v61
  %85 = vmatpush.msra.mxu0 %v60
  %86 = vmatpush.msra.mxu0 %v59
  %87 = vmatpush.msra.mxu0 %v58
  %88 = vmatpush.msra.mxu0 %v57
  %89 = vmatmul.f32.gmra.mxu0 %v71
  %v90 = vpop.f32.mrf.mxu0
  %v91 = vadd.f32 %v67, %v90
  %92 = vdwg.mxu0
  %vm93 = vcmask 7168
  %94 = vst.msk [vmem:[%s5] sm:$0xff] %vm93, %v91
  // Predicated region
  $region22: #{tpu_custom_call.1} parent=0 // pred_check
    _
  $region23: #{tpu_custom_call.1} parent=0 // pred_check_branch
    %96 = sbr.rel (0) target = $region25
  $region24: #{tpu_custom_call.1} parent=0 // pred_region
    _
  $region25: #{tpu_custom_call.1} parent=0 // pred_fallthru
    _
  // Predicated region
  $region26: #{tpu_custom_call.1} parent=0 // pred_check
    _
  $region27: #{tpu_custom_call.1} parent=0 // pred_check_branch
    %98 = sbr.rel (0) target = $region29
  $region28: #{tpu_custom_call.1} parent=0 // pred_region
    _
  $region29: #{tpu_custom_call.1} parent=0 // pred_fallthru
    _

</llo_original>
